<compile_context>
chip_gen: v5e
topology: v5e:2x2
jax: 0.10.0
libtpu: 0.0.40
codegen_flags: <defaults>
</compile_context>

<pallas_src>
import functools

import jax
import jax.numpy as jnp
from jax.experimental import pallas as pl
from jax.experimental.pallas import tpu as pltpu


def _round_up(x, m):
    return ((x + m - 1) // m) * m


def _device_tile_defaults():
    """Return (default block_rows, split-rows-across-TensorCores?)."""
    try:
        kind = jax.devices()[0].device_kind.lower()
    except Exception:
        return 1024, False
    # v5e: 16 MiB default scoped VMEM, ~0.8 TB/s HBM -> >=512-row tiles already
    # sit near the HBM roofline, so use the smaller default tile.
    if "v5 lite" in kind or "v5e" in kind or "v5lite" in kind:
        return 512, False
    # Chips with 2 TensorCores per chip: keep >=2 grid steps on the "parallel"
    # row axis so both cores get work.
    multi_tc = any(tag in kind for tag in ("v4", "v5p", "v7", "7x"))
    return 1024, multi_tc


def _const_block_spec(shape, single_buffer):
    """BlockSpec for a resident operand (same block at every grid step)."""
    index_map = lambda i: (0,) * len(shape)
    if single_buffer:
        # Constant-index operands gain nothing from double buffering; halving
        # their VMEM footprint matters most on v7x (64 MiB physical) and v5e
        # (16 MiB default scoped).
        return pl.BlockSpec(shape, index_map, pipeline_mode=pl.Buffered(1))
    return pl.BlockSpec(shape, index_map)


def _rna_decoder_kernel(x_ref, w1_ref, b1_ref, w2_ref, b2_ref, o_ref):
    # x_ref:  (bm, Cin)   tile of input rows (streamed)
    # w1_ref: (Cin, H)    fc1 weight, pre-transposed, resident
    # b1_ref: (1, H)      fc1 bias (f32), resident
    # w2_ref: (H, Cout)   fc2 weight, pre-transposed, resident
    # b2_ref: (1, Cout)   fc2 bias (f32), resident
    # o_ref:  (bm, Cout)  tile of output rows (streamed)
    x = x_ref[...].astype(w1_ref.dtype)              # bf16 MXU path if enabled
    h = jnp.dot(x, w1_ref[...], preferred_element_type=jnp.float32)
    h = jnp.maximum(h + b1_ref[...], 0.0)            # bias + ReLU in f32 (VPU)
    y = jnp.dot(h.astype(w2_ref.dtype), w2_ref[...],
                preferred_element_type=jnp.float32)
    o_ref[...] = (y + b2_ref[...]).astype(o_ref.dtype)


def prepare_params(w1, b1, w2, b2, *, compute_dtype=jnp.float32):
    """One-time parameter prep (NOT per call): transpose PyTorch Linear weights
    to [in, out] layout, optionally cast them to a narrower MXU dtype, and
    reshape biases to (1, features) in f32."""
    w1_t = jnp.asarray(w1, dtype=compute_dtype).T      # (Cin, H)
    w2_t = jnp.asarray(w2, dtype=compute_dtype).T      # (H, Cout)
    b1_2 = jnp.asarray(b1, dtype=jnp.float32).reshape(1, -1)
    b2_2 = jnp.asarray(b2, dtype=jnp.float32).reshape(1, -1)
    return w1_t, b1_2, w2_t, b2_2


@functools.partial(jax.jit,
                   static_argnames=("block_rows", "single_buffer_weights"))
def rna_decoder_forward(x, w1_t, b1, w2_t, b2, *, block_rows=None,
                        single_buffer_weights=True):
    """x: [..., Cin]; w1_t: [Cin, H]; b1: [1, H]; w2_t: [H, Cout]; b2: [1, Cout]."""
    cin = x.shape[-1]
    hidden = w1_t.shape[1]
    cout = w2_t.shape[1]
    lead = x.shape[:-1]
    x2 = x.reshape(-1, cin)
    n = x2.shape[0]

    default_rows, multi_tc = _device_tile_defaults()
    if block_rows is None:
        block_rows = default_rows

    bm = block_rows
    if multi_tc:
        # Ensure >=2 grid steps when possible so both TensorCores get rows.
        bm = min(bm, max(8, _round_up(pl.cdiv(n, 2), 8)))
    bm = max(8, min(bm, _round_up(n, 8)))
    grid = (pl.cdiv(n, bm),)

    x_bytes = jnp.dtype(x.dtype).itemsize
    w_bytes = jnp.dtype(w1_t.dtype).itemsize
    o_bytes = x_bytes

    # Explicit VMEM budget: streamed x/out double-buffered, resident weights
    # single- (or double-) buffered, plus f32 intermediates, plus headroom.
    weight_bufs = 1 if single_buffer_weights else 2
    resident = weight_bufs * ((cin * hidden + hidden * cout) * w_bytes
                              + (hidden + cout) * 4)
    streamed = 2 * bm * (cin * x_bytes + cout * o_bytes)
    compute = bm * (hidden + cout + cin) * 4
    vmem_limit = int(1.5 * (resident + streamed + compute)) + (2 << 20)
    vmem_limit = min(max(vmem_limit, 8 << 20), 64 << 20)

    cost = pl.CostEstimate(
        flops=2 * n * (cin * hidden + hidden * cout),
        transcendentals=0,
        bytes_accessed=(n * (cin * x_bytes + cout * o_bytes)
                        + (cin * hidden + hidden * cout) * w_bytes
                        + (hidden + cout) * 4),
    )

    out = pl.pallas_call(
        _rna_decoder_kernel,
        out_shape=jax.ShapeDtypeStruct((n, cout), x.dtype),
        grid_spec=pl.GridSpec(
            grid=grid,
            in_specs=[
                # Streamed input: tile rows, keep the feature dim whole (legal
                # because it equals the full array dim).
                pl.BlockSpec((bm, cin), lambda i: (i, 0)),
                # Resident weights / biases: same full block every grid step.
                _const_block_spec((cin, hidden), single_buffer_weights),
                _const_block_spec((1, hidden), single_buffer_weights),
                _const_block_spec((hidden, cout), single_buffer_weights),
                _const_block_spec((1, cout), single_buffer_weights),
            ],
            out_specs=pl.BlockSpec((bm, cout), lambda i: (i, 0)),
        ),
        compiler_params=pltpu.CompilerParams(
            dimension_semantics=("parallel",),
            vmem_limit_bytes=vmem_limit),
        cost_estimate=cost,
    )(x2, w1_t, b1, w2_t, b2)

    return out.reshape(lead + (cout,))


def init_params(key, in_channels, hidden_channels, out_channels,
                dtype=jnp.float32):
    """Deterministic synthetic parameters (PyTorch nn.Linear shapes/init)."""
    k1, k2, k3, k4 = jax.random.split(key, 4)
    bound1 = 1.0 / (in_channels ** 0.5)
    w1 = jax.random.uniform(k1, (hidden_channels, in_channels),
                            minval=-bound1, maxval=bound1, dtype=dtype)
    b1 = jax.random.uniform(k2, (hidden_channels,),
                            minval=-bound1, maxval=bound1, dtype=dtype)
    bound2 = 1.0 / (hidden_channels ** 0.5)
    w2 = jax.random.uniform(k3, (out_channels, hidden_channels),
                            minval=-bound2, maxval=bound2, dtype=dtype)
    b2 = jax.random.uniform(k4, (out_channels,),
                            minval=-bound2, maxval=bound2, dtype=dtype)
    return w1, b1, w2, b2


def reference_forward(x, w1, b1, w2, b2):
    """Pure-JAX reference mirroring the PyTorch module exactly."""
    h = jax.nn.relu(x @ w1.T + b1)
    return h @ w2.T + b2


if __name__ == "__main__":
    # Small shapes consistent with the module: batch=16 samples,
    # in_channels=32 -> hidden=64 -> out_channels=16.
    N, Cin, H, Cout = 16, 32, 64, 16

    key = jax.random.PRNGKey(0)
    kx, kp = jax.random.split(key)
    x = jax.random.normal(kx, (N, Cin), dtype=jnp.float32)
    w1, b1, w2, b2 = init_params(kp, Cin, H, Cout)
    ref = reference_forward(x, w1, b1, w2, b2)

    # ---- f32 path (bit-faithful to the reference within MXU tolerance) ----
    params_f32 = prepare_params(w1, b1, w2, b2, compute_dtype=jnp.float32)
    sbw = True
    try:
        out = jax.block_until_ready(
            rna_decoder_forward(x, *params_f32, single_buffer_weights=True))
    except Exception:
        # Fallback for JAX builds without per-BlockSpec pipeline_mode: keep
        # default (double-buffered) resident weights.
        sbw = False
        out = jax.block_until_ready(
            rna_decoder_forward(x, *params_f32, single_buffer_weights=False))
    assert out.shape == (N, Cout)
    assert jnp.allclose(out, ref, atol=2e-5, rtol=2e-5), "f32 mismatch vs reference"

    # ---- bf16 MXU path (halves weight/x HBM bytes; intentional mixed precision) ----
    params_bf16 = prepare_params(w1, b1, w2, b2, compute_dtype=jnp.bfloat16)
    out_bf16 = jax.block_until_ready(
        rna_decoder_forward(x, *params_bf16, single_buffer_weights=sbw))
    assert out_bf16.shape == (N, Cout)
    assert jnp.allclose(out_bf16, ref, atol=5e-2, rtol=5e-2), "bf16 mismatch vs reference"

    print("KERNEL_OK")
</pallas_src>

<mosaic_0001>
module attributes {stable_mosaic.version = 11 : i64} {
  func.func @_rna_decoder_kernel(%arg0: i32, %arg1: memref<16x32xf32, #tpu.memory_space<vmem>>, %arg2: memref<32x64xf32, #tpu.memory_space<vmem>>, %arg3: memref<1x64xf32, #tpu.memory_space<vmem>>, %arg4: memref<64x16xf32, #tpu.memory_space<vmem>>, %arg5: memref<1x16xf32, #tpu.memory_space<vmem>>, %arg6: memref<16x16xf32, #tpu.memory_space<vmem>>) attributes {dimension_semantics = [#tpu.dimension_semantics<parallel>], iteration_bounds = array<i64: 1>, scalar_prefetch = 0 : i64, scratch_operands = 0 : i64, tpu.core_type = #tpu.core_type<tc>, window_params = [{transform_indices = @transform_0, window_bounds = array<i64: 16, 32>}, {pipeline_mode = #tpu.pipeline_mode<synchronous>, transform_indices = @transform_1, window_bounds = array<i64: 32, 64>}, {pipeline_mode = #tpu.pipeline_mode<synchronous>, transform_indices = @transform_2, window_bounds = array<i64: 1, 64>}, {pipeline_mode = #tpu.pipeline_mode<synchronous>, transform_indices = @transform_3, window_bounds = array<i64: 64, 16>}, {pipeline_mode = #tpu.pipeline_mode<synchronous>, transform_indices = @transform_4, window_bounds = array<i64: 1, 16>}, {transform_indices = @transform_5, window_bounds = array<i64: 16, 16>}]} {
    %c0 = arith.constant 0 : index
    %c0_0 = arith.constant 0 : index
    %0 = vector.load %arg1[%c0, %c0_0] : memref<16x32xf32, #tpu.memory_space<vmem>>, vector<16x32xf32>
    %c0_1 = arith.constant 0 : index
    %c0_2 = arith.constant 0 : index
    %1 = vector.load %arg2[%c0_1, %c0_2] : memref<32x64xf32, #tpu.memory_space<vmem>>, vector<32x64xf32>
    %cst = arith.constant dense<0.000000e+00> : vector<16x64xf32>
    %2 = tpu.matmul %0, %1, %cst {dimension_numbers = #tpu.dot_dimension_numbers<[1], [0], [0], [1], [0, 0, 1, 1], [], []>} : vector<16x32xf32>, vector<32x64xf32>, vector<16x64xf32> -> vector<16x64xf32>
    %c0_3 = arith.constant 0 : index
    %c0_4 = arith.constant 0 : index
    %3 = vector.load %arg3[%c0_3, %c0_4] : memref<1x64xf32, #tpu.memory_space<vmem>>, vector<1x64xf32>
    %4 = vector.broadcast %3 : vector<1x64xf32> to vector<16x64xf32>
    %5 = arith.addf %2, %4 : vector<16x64xf32>
    %cst_5 = arith.constant 0.000000e+00 : f32
    %6 = vector.broadcast %cst_5 : f32 to vector<16x64xf32>
    %7 = arith.maximumf %5, %6 : vector<16x64xf32>
    %c0_6 = arith.constant 0 : index
    %c0_7 = arith.constant 0 : index
    %8 = vector.load %arg4[%c0_6, %c0_7] : memref<64x16xf32, #tpu.memory_space<vmem>>, vector<64x16xf32>
    %cst_8 = arith.constant dense<0.000000e+00> : vector<16x16xf32>
    %9 = tpu.matmul %7, %8, %cst_8 {dimension_numbers = #tpu.dot_dimension_numbers<[1], [0], [0], [1], [0, 0, 1, 1], [], []>} : vector<16x64xf32>, vector<64x16xf32>, vector<16x16xf32> -> vector<16x16xf32>
    %c0_9 = arith.constant 0 : index
    %c0_10 = arith.constant 0 : index
    %10 = vector.load %arg5[%c0_9, %c0_10] : memref<1x16xf32, #tpu.memory_space<vmem>>, vector<1x16xf32>
    %11 = vector.broadcast %10 : vector<1x16xf32> to vector<16x16xf32>
    %12 = arith.addf %9, %11 : vector<16x16xf32>
    %c0_11 = arith.constant 0 : index
    %c0_12 = arith.constant 0 : index
    %13 = vector.load %arg6[%c0_11, %c0_12] : memref<16x16xf32, #tpu.memory_space<vmem>>, vector<16x16xf32>
    tpu.vector_store %arg6[%c0_11, %c0_12], %12 {strides = array<i32>} : memref<16x16xf32, #tpu.memory_space<vmem>>, vector<16x16xf32>,
    return
  }
  func.func @transform_0(%arg0: i32) -> (i32, i32) {
    %c0_i32 = arith.constant 0 : i32
    %c0_i32_0 = arith.constant 0 : i32
    return %arg0, %c0_i32 : i32, i32
  }
  func.func @transform_1(%arg0: i32) -> (i32, i32) {
    %c0_i32 = arith.constant 0 : i32
    %c0_i32_0 = arith.constant 0 : i32
    %c0_i32_1 = arith.constant 0 : i32
    return %c0_i32, %c0_i32_0 : i32, i32
  }
  func.func @transform_2(%arg0: i32) -> (i32, i32) {
    %c0_i32 = arith.constant 0 : i32
    %c0_i32_0 = arith.constant 0 : i32
    %c0_i32_1 = arith.constant 0 : i32
    return %c0_i32, %c0_i32_0 : i32, i32
  }
  func.func @transform_3(%arg0: i32) -> (i32, i32) {
    %c0_i32 = arith.constant 0 : i32
    %c0_i32_0 = arith.constant 0 : i32
    %c0_i32_1 = arith.constant 0 : i32
    return %c0_i32, %c0_i32_0 : i32, i32
  }
  func.func @transform_4(%arg0: i32) -> (i32, i32) {
    %c0_i32 = arith.constant 0 : i32
    %c0_i32_0 = arith.constant 0 : i32
    %c0_i32_1 = arith.constant 0 : i32
    return %c0_i32, %c0_i32_0 : i32, i32
  }
  func.func @transform_5(%arg0: i32) -> (i32, i32) {
    %c0_i32 = arith.constant 0 : i32
    %c0_i32_0 = arith.constant 0 : i32
    return %arg0, %c0_i32 : i32, i32
  }
}

module attributes {stable_mosaic.version = 11 : i64} {
  func.func @_rna_decoder_kernel(%arg0: i32, %arg1: memref<16x32xf32, #tpu.memory_space<vmem>>, %arg2: memref<32x64xf32, #tpu.memory_space<vmem>>, %arg3: memref<1x64xf32, #tpu.memory_space<vmem>>, %arg4: memref<64x16xf32, #tpu.memory_space<vmem>>, %arg5: memref<1x16xf32, #tpu.memory_space<vmem>>, %arg6: memref<16x16xf32, #tpu.memory_space<vmem>>) attributes {dimension_semantics = [#tpu.dimension_semantics<parallel>], iteration_bounds = array<i64: 1>, scalar_prefetch = 0 : i64, scratch_operands = 0 : i64, tpu.core_type = #tpu.core_type<tc>, window_params = [{transform_indices = @transform_0, window_bounds = array<i64: 16, 32>}, {pipeline_mode = #tpu.pipeline_mode<synchronous>, transform_indices = @transform_1, window_bounds = array<i64: 32, 64>}, {pipeline_mode = #tpu.pipeline_mode<synchronous>, transform_indices = @transform_2, window_bounds = array<i64: 1, 64>}, {pipeline_mode = #tpu.pipeline_mode<synchronous>, transform_indices = @transform_3, window_bounds = array<i64: 64, 16>}, {pipeline_mode = #tpu.pipeline_mode<synchronous>, transform_indices = @transform_4, window_bounds = array<i64: 1, 16>}, {transform_indices = @transform_5, window_bounds = array<i64: 16, 16>}]} {
    %c0 = arith.constant 0 : index
    %c0_0 = arith.constant 0 : index
    %0 = vector.load %arg1[%c0, %c0_0] : memref<16x32xf32, #tpu.memory_space<vmem>>, vector<16x32xf32>
    %c0_1 = arith.constant 0 : index
    %c0_2 = arith.constant 0 : index
    %1 = vector.load %arg2[%c0_1, %c0_2] : memref<32x64xf32, #tpu.memory_space<vmem>>, vector<32x64xf32>
    %cst = arith.constant dense<0.000000e+00> : vector<16x64xf32>
    %2 = tpu.matmul %0, %1, %cst {dimension_numbers = #tpu.dot_dimension_numbers<[1], [0], [0], [1], [0, 0, 1, 1], [], []>} : vector<16x32xf32>, vector<32x64xf32>, vector<16x64xf32> -> vector<16x64xf32>
    %c0_3 = arith.constant 0 : index
    %c0_4 = arith.constant 0 : index
    %3 = vector.load %arg3[%c0_3, %c0_4] : memref<1x64xf32, #tpu.memory_space<vmem>>, vector<1x64xf32>
    %4 = vector.broadcast %3 : vector<1x64xf32> to vector<16x64xf32>
    %5 = arith.addf %2, %4 : vector<16x64xf32>
    %cst_5 = arith.constant 0.000000e+00 : f32
    %6 = vector.broadcast %cst_5 : f32 to vector<16x64xf32>
    %7 = arith.maximumf %5, %6 : vector<16x64xf32>
    %c0_6 = arith.constant 0 : index
    %c0_7 = arith.constant 0 : index
    %8 = vector.load %arg4[%c0_6, %c0_7] : memref<64x16xf32, #tpu.memory_space<vmem>>, vector<64x16xf32>
    %cst_8 = arith.constant dense<0.000000e+00> : vector<16x16xf32>
    %9 = tpu.matmul %7, %8, %cst_8 {dimension_numbers = #tpu.dot_dimension_numbers<[1], [0], [0], [1], [0, 0, 1, 1], [], []>} : vector<16x64xf32>, vector<64x16xf32>, vector<16x16xf32> -> vector<16x16xf32>
    %c0_9 = arith.constant 0 : index
    %c0_10 = arith.constant 0 : index
    %10 = vector.load %arg5[%c0_9, %c0_10] : memref<1x16xf32, #tpu.memory_space<vmem>>, vector<1x16xf32>
    %11 = vector.broadcast %10 : vector<1x16xf32> to vector<16x16xf32>
    %12 = arith.addf %9, %11 : vector<16x16xf32>
    %c0_11 = arith.constant 0 : index
    %c0_12 = arith.constant 0 : index
    %13 = vector.load %arg6[%c0_11, %c0_12] : memref<16x16xf32, #tpu.memory_space<vmem>>, vector<16x16xf32>
    tpu.vector_store %arg6[%c0_11, %c0_12], %12 {strides = array<i32>} : memref<16x16xf32, #tpu.memory_space<vmem>>, vector<16x16xf32>,
    return
  }
  func.func @transform_0(%arg0: i32) -> (i32, i32) {
    %c0_i32 = arith.constant 0 : i32
    %c0_i32_0 = arith.constant 0 : i32
    return %arg0, %c0_i32 : i32, i32
  }
  func.func @transform_1(%arg0: i32) -> (i32, i32) {
    %c0_i32 = arith.constant 0 : i32
    %c0_i32_0 = arith.constant 0 : i32
    %c0_i32_1 = arith.constant 0 : i32
    return %c0_i32, %c0_i32_0 : i32, i32
  }
  func.func @transform_2(%arg0: i32) -> (i32, i32) {
    %c0_i32 = arith.constant 0 : i32
    %c0_i32_0 = arith.constant 0 : i32
    %c0_i32_1 = arith.constant 0 : i32
    return %c0_i32, %c0_i32_0 : i32, i32
  }
  func.func @transform_3(%arg0: i32) -> (i32, i32) {
    %c0_i32 = arith.constant 0 : i32
    %c0_i32_0 = arith.constant 0 : i32
    %c0_i32_1 = arith.constant 0 : i32
    return %c0_i32, %c0_i32_0 : i32, i32
  }
  func.func @transform_4(%arg0: i32) -> (i32, i32) {
    %c0_i32 = arith.constant 0 : i32
    %c0_i32_0 = arith.constant 0 : i32
    %c0_i32_1 = arith.constant 0 : i32
    return %c0_i32, %c0_i32_0 : i32, i32
  }
  func.func @transform_5(%arg0: i32) -> (i32, i32) {
    %c0_i32 = arith.constant 0 : i32
    %c0_i32_0 = arith.constant 0 : i32
    return %arg0, %c0_i32 : i32, i32
  }
}

</mosaic_0001>

<llo_original>
// kernel: rna_decoder_forward.1
$region0: #{rna_decoder_forward.1}
  #allocation0 [shape = 'u32[]', space=smem, size = 0x4, offset = 0x4, fixed_abs, tag = 'smem constant byte address 0x4 - core index']
  #allocation1 [shape = 'u32[72,128]{1,0:T(1,128)}', space=vmem, size = 0x9000, scoped, tag = 'internal scratch']
  %s0 = inlined_call_operand.vmem [shape: f32[16,32], index: 0, kind: input, shape index: {}]
  %s1 = inlined_call_operand.vmem [shape: f32[32,64], index: 1, kind: input, shape index: {}]
  %s2 = inlined_call_operand.vmem [shape: f32[1,64], index: 2, kind: input, shape index: {}]
  %s3 = inlined_call_operand.vmem [shape: f32[64,16], index: 3, kind: input, shape index: {}]
  %s4 = inlined_call_operand.vmem [shape: f32[1,16], index: 4, kind: input, shape index: {}]
  %s5 = inlined_call_operand.hbm [shape: f32[16,16], index: 5, kind: output, shape index: {}]
  %s6 = sld [smem:[#allocation0]]
  $region30: #{rna_decoder_forward.1} parent=0
    _
  %s8 = ssub.s32 1, %s6
  %s9 = scalar_select 0, %s8, %s6
  $region1: #{rna_decoder_forward.1} parent=0
    #allocation2 [shape = 'u8[8192]{0}', space=vmem, size = 0x2000, scoped, tag = 'output window, operand 0, single buffered']
    #allocation3 [shape = 's32[1]{0}', space=sflag, size = 0x4, scoped, tag = 'scoped memory for rna_decoder_forward.1']
    %10 = vsyncpa [#allocation3], 0
    // Predicated region
    $region2: #{rna_decoder_forward.1} parent=1 // pred_check
      _
    $region3: #{rna_decoder_forward.1} parent=1 // pred_check_branch
      %12 = sbr.rel (0) target = $region5
    $region4: #{rna_decoder_forward.1} parent=1 // pred_region
      _
    $region5: #{rna_decoder_forward.1} parent=1 // pred_fallthru
      _
    // Predicated region
    $region6: #{rna_decoder_forward.1} parent=1 // pred_check
      _
    $region7: #{rna_decoder_forward.1} parent=1 // pred_check_branch
      %14 = sbr.rel (0) target = $region9
    $region8: #{rna_decoder_forward.1} parent=1 // pred_region
      _
    $region9: #{rna_decoder_forward.1} parent=1 // pred_fallthru
      _
    // Predicated region
    $region10: #{rna_decoder_forward.1} parent=1 // pred_check
      _
    $region11: #{rna_decoder_forward.1} parent=1 // pred_check_branch
      %16 = sbr.rel (0) target = $region13
    $region12: #{rna_decoder_forward.1} parent=1 // pred_region
      _
    $region13: #{rna_decoder_forward.1} parent=1 // pred_fallthru
      _
    // Predicated region
    $region14: #{rna_decoder_forward.1} parent=1 // pred_check
      _
    $region15: #{rna_decoder_forward.1} parent=1 // pred_check_branch
      %18 = sbr.rel (0) target = $region17
    $region16: #{rna_decoder_forward.1} parent=1 // pred_region
      _
    $region17: #{rna_decoder_forward.1} parent=1 // pred_fallthru
      _
    // Predicated region
    $region18: #{rna_decoder_forward.1} parent=1 // pred_check
      _
    $region19: #{rna_decoder_forward.1} parent=1 // pred_check_branch
      %20 = sbr.rel (0) target = $region21
    $region20: #{rna_decoder_forward.1} parent=1 // pred_region
      _
    $region21: #{rna_decoder_forward.1} parent=1 // pred_fallthru
      _
    %v21 = vld [vmem:[%s0] sm:$0xff]
    %v22 = vld [vmem:[%s0 + $0x8] sm:$0xff]
    %v23 = vld [vmem:[%s1] sm:$0xff]
    %v24 = vld [vmem:[%s1 + $0x8] sm:$0xff]
    %v25 = vld [vmem:[%s1 + $0x10] sm:$0xff]
    %v26 = vld [vmem:[%s1 + $0x18] sm:$0xff]
    %v27 = vld [vmem:[%s2] sm:$0x1]
    %v29 = vperm.slane %v27, 0
    %vm31 = vcmask 261120
    %v33 = vsel %vm31, %v21, 0
    %v36 = vsel %vm31, %v22, 0
    %38 = vmatpush.msra.mxu0 0.0
    %39 = vmatpush.msra.mxu0 0.0
    %40 = vmatpush.msra.mxu0 0.0
    %41 = vmatpush.msra.mxu0 0.0
    %42 = vmatpush.msra.mxu0 0.0
    %43 = vmatpush.msra.mxu0 0.0
    %44 = vmatpush.msra.mxu0 0.0
    %45 = vmatpush.msra.mxu0 0.0
    %46 = vmatpush.msra.mxu0 0.0
    %47 = vmatpush.msra.mxu0 0.0
    %48 = vmatpush.msra.mxu0 0.0
    %49 = vmatpush.msra.mxu0 0.0
    %50 = vmatpush.msra.mxu0 %v26
    %51 = vmatpush.msra.mxu0 %v25
    %52 = vmatpush.msra.mxu0 %v24
    %53 = vmatpush.msra.mxu0 %v23
    %54 = vmatmul.f32.gmra.mxu0 %v33
    %v55 = vpop.f32.mrf.mxu0
    %v56 = vadd.f32 %v29, %v55
    %57 = vmatmul.f32.gmra.mxu0 %v36
    %v58 = vpop.f32.mrf.mxu0
    %v59 = vadd.f32 %v29, %v58
    %60 = vdwg.mxu0
    %v61 = vmax.f32 %v56, 0.0
    %v62 = vmax.f32 %v59, 0.0
    %v63 = vld [vmem:[%s3] sm:$0xff]
    %v64 = vld [vmem:[%s3 + $0x8] sm:$0xff]
    %v65 = vld [vmem:[%s3 + $0x10] sm:$0xff]
    %v66 = vld [vmem:[%s3 + $0x18] sm:$0xff]
    %v67 = vld [vmem:[%s3 + $0x20] sm:$0xff]
    %v68 = vld [vmem:[%s3 + $0x28] sm:$0xff]
    %v69 = vld [vmem:[%s3 + $0x30] sm:$0xff]
    %v70 = vld [vmem:[%s3 + $0x38] sm:$0xff]
    %v71 = vld [vmem:[%s4] sm:$0x1]
    %v73 = vperm.slane %v71, 0
    %vm75 = vcmask 523264
    %v77 = vsel %vm75, %v61, 0
    %v80 = vsel %vm75, %v62, 0
    %82 = vmatpush.msra.mxu0 0.0
    %83 = vmatpush.msra.mxu0 0.0
    %84 = vmatpush.msra.mxu0 0.0
    %85 = vmatpush.msra.mxu0 0.0
    %86 = vmatpush.msra.mxu0 0.0
    %87 = vmatpush.msra.mxu0 0.0
    %88 = vmatpush.msra.mxu0 0.0
    %89 = vmatpush.msra.mxu0 0.0
    %90 = vmatpush.msra.mxu0 %v70
    %91 = vmatpush.msra.mxu0 %v69
    %92 = vmatpush.msra.mxu0 %v68
    %93 = vmatpush.msra.mxu0 %v67
    %94 = vmatpush.msra.mxu0 %v66
    %95 = vmatpush.msra.mxu0 %v65
    %96 = vmatpush.msra.mxu0 %v64
    %97 = vmatpush.msra.mxu0 %v63
    %98 = vmatmul.f32.gmra.mxu0 %v77
    %v99 = vpop.f32.mrf.mxu0
    %v100 = vadd.f32 %v73, %v99
    %101 = vmatmul.f32.gmra.mxu0 %v80
    %v102 = vpop.f32.mrf.mxu0
    %v103 = vadd.f32 %v73, %v102
    %104 = vdwg.mxu0
    %vm105 = vcmask 130048
    %106 = vst.msk [vmem:[#allocation2] sm:$0xff] %vm105, %v100
    %107 = vst.msk [vmem:[#allocation2 + $0x8] sm:$0xff] %vm105, %v103
    // Predicated region
    $region22: #{rna_decoder_forward.1} parent=1 // pred_check
      _
    $region23: #{rna_decoder_forward.1} parent=1 // pred_check_branch
      %109 = sbr.rel (0) target = $region25
    $region24: #{rna_decoder_forward.1} parent=1 // pred_region
      %111 = vsyncadd [#allocation3], 0
      %s112 = sshll.u32 [#allocation2], 4
      %s113 = int_to_ptr.vmem [resolvable:$true] %s112
      %s114 = sshll.u32 %s5, 4
      %s115 = int_to_ptr.hbm [resolvable:$true] %s114
      %120 = dma.vmem_to_hbm [thread:$0]  %s113, 256, %s115, [#allocation3], 128, 128, 8
    $region25: #{rna_decoder_forward.1} parent=1 // pred_fallthru
      _
    // Predicated region
    $region26: #{rna_decoder_forward.1} parent=1 // pred_check
      _
    $region27: #{rna_decoder_forward.1} parent=1 // pred_check_branch
      %122 = sbr.rel (0) target = $region29
    $region28: #{rna_decoder_forward.1} parent=1 // pred_region
      %124 = dma.done [#allocation3], 256
    $region29: #{rna_decoder_forward.1} parent=1 // pred_fallthru
      _
    %125 = vsyncpa [#allocation3], 1

// kernel: rna_decoder_forward.1
$region0: #{rna_decoder_forward.1}
  #allocation0 [shape = 'u32[]', space=smem, size = 0x4, offset = 0x4, fixed_abs, tag = 'smem constant byte address 0x4 - core index']
  #allocation1 [shape = 'u32[72,128]{1,0:T(1,128)}', space=vmem, size = 0x9000, scoped, tag = 'internal scratch']
  %s0 = inlined_call_operand.vmem [shape: f32[16,32], index: 0, kind: input, shape index: {}]
  %s1 = inlined_call_operand.vmem [shape: f32[32,64], index: 1, kind: input, shape index: {}]
  %s2 = inlined_call_operand.vmem [shape: f32[1,64], index: 2, kind: input, shape index: {}]
  %s3 = inlined_call_operand.vmem [shape: f32[64,16], index: 3, kind: input, shape index: {}]
  %s4 = inlined_call_operand.vmem [shape: f32[1,16], index: 4, kind: input, shape index: {}]
  %s5 = inlined_call_operand.hbm [shape: f32[16,16], index: 5, kind: output, shape index: {}]
  %s6 = sld [smem:[#allocation0]]
  $region30: #{rna_decoder_forward.1} parent=0
    _
  %s8 = ssub.s32 1, %s6
  %s9 = scalar_select 0, %s8, %s6
  $region1: #{rna_decoder_forward.1} parent=0
    #allocation2 [shape = 'u8[8192]{0}', space=vmem, size = 0x2000, scoped, tag = 'output window, operand 0, single buffered']
    #allocation3 [shape = 's32[1]{0}', space=sflag, size = 0x4, scoped, tag = 'scoped memory for rna_decoder_forward.1']
    %10 = vsyncpa [#allocation3], 0
    // Predicated region
    $region2: #{rna_decoder_forward.1} parent=1 // pred_check
      _
    $region3: #{rna_decoder_forward.1} parent=1 // pred_check_branch
      %12 = sbr.rel (0) target = $region5
    $region4: #{rna_decoder_forward.1} parent=1 // pred_region
      _
    $region5: #{rna_decoder_forward.1} parent=1 // pred_fallthru
      _
    // Predicated region
    $region6: #{rna_decoder_forward.1} parent=1 // pred_check
      _
    $region7: #{rna_decoder_forward.1} parent=1 // pred_check_branch
      %14 = sbr.rel (0) target = $region9
    $region8: #{rna_decoder_forward.1} parent=1 // pred_region
      _
    $region9: #{rna_decoder_forward.1} parent=1 // pred_fallthru
      _
    // Predicated region
    $region10: #{rna_decoder_forward.1} parent=1 // pred_check
      _
    $region11: #{rna_decoder_forward.1} parent=1 // pred_check_branch
      %16 = sbr.rel (0) target = $region13
    $region12: #{rna_decoder_forward.1} parent=1 // pred_region
      _
    $region13: #{rna_decoder_forward.1} parent=1 // pred_fallthru
      _
    // Predicated region
    $region14: #{rna_decoder_forward.1} parent=1 // pred_check
      _
    $region15: #{rna_decoder_forward.1} parent=1 // pred_check_branch
      %18 = sbr.rel (0) target = $region17
    $region16: #{rna_decoder_forward.1} parent=1 // pred_region
      _
    $region17: #{rna_decoder_forward.1} parent=1 // pred_fallthru
      _
    // Predicated region
    $region18: #{rna_decoder_forward.1} parent=1 // pred_check
      _
    $region19: #{rna_decoder_forward.1} parent=1 // pred_check_branch
      %20 = sbr.rel (0) target = $region21
    $region20: #{rna_decoder_forward.1} parent=1 // pred_region
      _
    $region21: #{rna_decoder_forward.1} parent=1 // pred_fallthru
      _
    %v21 = vld [vmem:[%s0] sm:$0xff]
    %v22 = vld [vmem:[%s0 + $0x8] sm:$0xff]
    %v23 = vld [vmem:[%s1] sm:$0xff]
    %v24 = vld [vmem:[%s1 + $0x8] sm:$0xff]
    %v25 = vld [vmem:[%s1 + $0x10] sm:$0xff]
    %v26 = vld [vmem:[%s1 + $0x18] sm:$0xff]
    %v27 = vld [vmem:[%s2] sm:$0x1]
    %v29 = vperm.slane %v27, 0
    %vm31 = vcmask 261120
    %v33 = vsel %vm31, %v21, 0
    %v36 = vsel %vm31, %v22, 0
    %38 = vmatpush.msra.mxu0 0.0
    %39 = vmatpush.msra.mxu0 0.0
    %40 = vmatpush.msra.mxu0 0.0
    %41 = vmatpush.msra.mxu0 0.0
    %42 = vmatpush.msra.mxu0 0.0
    %43 = vmatpush.msra.mxu0 0.0
    %44 = vmatpush.msra.mxu0 0.0
    %45 = vmatpush.msra.mxu0 0.0
    %46 = vmatpush.msra.mxu0 0.0
    %47 = vmatpush.msra.mxu0 0.0
    %48 = vmatpush.msra.mxu0 0.0
    %49 = vmatpush.msra.mxu0 0.0
    %50 = vmatpush.msra.mxu0 %v26
    %51 = vmatpush.msra.mxu0 %v25
    %52 = vmatpush.msra.mxu0 %v24
    %53 = vmatpush.msra.mxu0 %v23
    %54 = vmatmul.f32.gmra.mxu0 %v33
    %v55 = vpop.f32.mrf.mxu0
    %v56 = vadd.f32 %v29, %v55
    %57 = vmatmul.f32.gmra.mxu0 %v36
    %v58 = vpop.f32.mrf.mxu0
    %v59 = vadd.f32 %v29, %v58
    %60 = vdwg.mxu0
    %v61 = vmax.f32 %v56, 0.0
    %v62 = vmax.f32 %v59, 0.0
    %v63 = vld [vmem:[%s3] sm:$0xff]
    %v64 = vld [vmem:[%s3 + $0x8] sm:$0xff]
    %v65 = vld [vmem:[%s3 + $0x10] sm:$0xff]
    %v66 = vld [vmem:[%s3 + $0x18] sm:$0xff]
    %v67 = vld [vmem:[%s3 + $0x20] sm:$0xff]
    %v68 = vld [vmem:[%s3 + $0x28] sm:$0xff]
    %v69 = vld [vmem:[%s3 + $0x30] sm:$0xff]
    %v70 = vld [vmem:[%s3 + $0x38] sm:$0xff]
    %v71 = vld [vmem:[%s4] sm:$0x1]
    %v73 = vperm.slane %v71, 0
    %vm75 = vcmask 523264
    %v77 = vsel %vm75, %v61, 0
    %v80 = vsel %vm75, %v62, 0
    %82 = vmatpush.msra.mxu0 0.0
    %83 = vmatpush.msra.mxu0 0.0
    %84 = vmatpush.msra.mxu0 0.0
    %85 = vmatpush.msra.mxu0 0.0
    %86 = vmatpush.msra.mxu0 0.0
    %87 = vmatpush.msra.mxu0 0.0
    %88 = vmatpush.msra.mxu0 0.0
    %89 = vmatpush.msra.mxu0 0.0
    %90 = vmatpush.msra.mxu0 %v70
    %91 = vmatpush.msra.mxu0 %v69
    %92 = vmatpush.msra.mxu0 %v68
    %93 = vmatpush.msra.mxu0 %v67
    %94 = vmatpush.msra.mxu0 %v66
    %95 = vmatpush.msra.mxu0 %v65
    %96 = vmatpush.msra.mxu0 %v64
    %97 = vmatpush.msra.mxu0 %v63
    %98 = vmatmul.f32.gmra.mxu0 %v77
    %v99 = vpop.f32.mrf.mxu0
    %v100 = vadd.f32 %v73, %v99
    %101 = vmatmul.f32.gmra.mxu0 %v80
    %v102 = vpop.f32.mrf.mxu0
    %v103 = vadd.f32 %v73, %v102
    %104 = vdwg.mxu0
    %vm105 = vcmask 130048
    %106 = vst.msk [vmem:[#allocation2] sm:$0xff] %vm105, %v100
    %107 = vst.msk [vmem:[#allocation2 + $0x8] sm:$0xff] %vm105, %v103
    // Predicated region
    $region22: #{rna_decoder_forward.1} parent=1 // pred_check
      _
    $region23: #{rna_decoder_forward.1} parent=1 // pred_check_branch
      %109 = sbr.rel (0) target = $region25
    $region24: #{rna_decoder_forward.1} parent=1 // pred_region
      %111 = vsyncadd [#allocation3], 0
      %s112 = sshll.u32 [#allocation2], 4
      %s113 = int_to_ptr.vmem [resolvable:$true] %s112
      %s114 = sshll.u32 %s5, 4
      %s115 = int_to_ptr.hbm [resolvable:$true] %s114
      %120 = dma.vmem_to_hbm [thread:$0]  %s113, 256, %s115, [#allocation3], 128, 128, 8
    $region25: #{rna_decoder_forward.1} parent=1 // pred_fallthru
      _
    // Predicated region
    $region26: #{rna_decoder_forward.1} parent=1 // pred_check
      _
    $region27: #{rna_decoder_forward.1} parent=1 // pred_check_branch
      %122 = sbr.rel (0) target = $region29
    $region28: #{rna_decoder_forward.1} parent=1 // pred_region
      %124 = dma.done [#allocation3], 256
    $region29: #{rna_decoder_forward.1} parent=1 // pred_fallthru
      _
    %125 = vsyncpa [#allocation3], 1

</llo_original>
